<compile_context>
chip_gen: v7x
topology: tpu7x:2x2x1
jax: 0.10.0
libtpu: 0.0.40
codegen_flags: <defaults>
</compile_context>

<pallas_src>
import jax
import jax.numpy as jnp
import numpy as np
from jax.experimental import pallas as pl
from jax.experimental.pallas import tpu as pltpu


def _spatial_attn_kernel(x_ref, k_ref, bst_ref, vs_ref, out_ref):
    # x_ref:   (bb, N, C*T)  batch block of inputs, features/timesteps flattened
    # k_ref:   (C*T, 2T)     fused projection matrix  [K_lhs | K_rhs]
    # bst_ref: (N, N)        transposed bias  b_s^T
    # vs_ref:  (N, N)        V_s
    # out_ref: (bb, N, N)    transposed normalized scores  S_norm^T
    x2 = x_ref[...]
    k = k_ref[...]
    bs_t = bst_ref[...]
    v_s = vs_ref[...]

    t = k.shape[1] // 2

    # One fused MXU matmul replaces both weight contractions:
    #   proj[..., :T]  = lhs   = (x @ W1) @ W2         (bb, N, T)
    #   proj[..., T:]  = rhs^T = einsum('bnct,c->bnt')  (bb, N, T)
    proj = jnp.einsum('bnk,kt->bnt', x2, k, preferred_element_type=jnp.float32)
    lhs = proj[..., :t]
    rhs_t = proj[..., t:]

    # Transposed problem: prod_t[b, m, n] = product[b, n, m]   (batched over the block)
    prod_t = jnp.einsum('bmt,bnt->bmn', rhs_t, lhs,
                        preferred_element_type=jnp.float32)
    p_t = jnp.maximum(prod_t + bs_t[None, :, :], 0.0)

    # S^T = relu(product + b_s)^T @ V_s^T  — computed without any in-kernel transpose.
    s_t = jnp.einsum('bmk,nk->bmn', p_t, v_s,
                     preferred_element_type=jnp.float32)

    # Softmax over torch dim 1 of S == last (lane) axis of the transposed problem.
    s_t = s_t - jnp.max(s_t, axis=-1, keepdims=True)
    e = jnp.exp(s_t)
    denom = jnp.sum(e, axis=-1, keepdims=True)
    out_ref[...] = e * pl.reciprocal(denom, approx=True)
    # F.relu(softmax) is the identity (softmax > 0) — intentionally omitted.


def spatial_attention(x, w1, w2, w3, b_s, v_s, batch_block=8):
    """x: (B, N, C, T) float32 -> (B, N, N) float32 spatial attention scores."""
    B, N, C, T = x.shape
    bb = min(B, batch_block)
    pad = (-B) % bb
    if pad:  # pad batch so the batch-block grid tiles evenly; sliced off below
        x = jnp.concatenate([x, jnp.zeros((pad,) + x.shape[1:], x.dtype)], axis=0)
    Bp = B + pad

    # Flatten (C, T) -> C*T once in the wrapper (free reshape).
    x2 = x.reshape(Bp, N, C * T).astype(jnp.float32)

    # Precompute the fused projection matrix K (C*T, 2T):
    #   K1[c*T + t, t'] = W1[t] * W2[c, t']        -> lhs
    #   K2[c*T + t, t'] = W3[c] * delta(t, t')     -> rhs^T
    k1 = (w1[None, :, None] * w2[:, None, :]).reshape(C * T, T)
    k2 = (w3[:, None, None] * jnp.eye(T, dtype=jnp.float32)[None, :, :]).reshape(C * T, T)
    k_mat = jnp.concatenate([k1, k2], axis=1)          # (C*T, 2T)
    bs_t = jnp.transpose(b_s[0])                       # (N, N) transposed bias

    out_t = pl.pallas_call(
        _spatial_attn_kernel,
        out_shape=jax.ShapeDtypeStruct((Bp, N, N), jnp.float32),
        grid=(Bp // bb,),
        in_specs=[
            pl.BlockSpec((bb, N, C * T), lambda i: (i, 0, 0)),
            pl.BlockSpec((C * T, 2 * T), lambda i: (0, 0)),
            pl.BlockSpec((N, N), lambda i: (0, 0)),
            pl.BlockSpec((N, N), lambda i: (0, 0)),
        ],
        out_specs=pl.BlockSpec((bb, N, N), lambda i: (i, 0, 0)),
        compiler_params=pltpu.CompilerParams(
            dimension_semantics=("parallel",)),   # batch blocks are independent
    )(x2, k_mat, bs_t, v_s)

    # Kernel produced S_norm^T; un-transpose in the wrapper (layout plumbing, not compute).
    return jnp.transpose(out_t[:B], (0, 2, 1))


def reference_forward(x, w1, w2, w3, b_s, v_s):
    """Pure-JAX transcription of the PyTorch forward, for validation."""
    lhs = jnp.matmul(jnp.matmul(x, w1), w2)                  # (B, N, T)
    rhs = jnp.matmul(jnp.transpose(x, (0, 3, 1, 2)), w3)     # (B, T, N)
    product = jnp.matmul(lhs, rhs)                           # (B, N, N)
    s = jnp.matmul(v_s, jax.nn.relu(product + b_s))          # (B, N, N)
    s = s - jnp.max(s, axis=1, keepdims=True)
    e = jnp.exp(s)
    s_norm = e / jnp.sum(e, axis=1, keepdims=True)
    return jax.nn.relu(s_norm)


if __name__ == "__main__":
    # Module config: num_of_vertices=N, num_of_features=C, num_of_timesteps=T
    B, N, C, T = 2, 16, 4, 8

    key = jax.random.PRNGKey(0)
    kx, k1, k2, k3, kb, kv = jax.random.split(key, 6)

    # Deterministic "torch.randn"-style parameter init (standard normal)
    x = jax.random.normal(kx, (B, N, C, T), dtype=jnp.float32)
    W_1 = jax.random.normal(k1, (T,), dtype=jnp.float32)
    W_2 = jax.random.normal(k2, (C, T), dtype=jnp.float32)
    W_3 = jax.random.normal(k3, (C,), dtype=jnp.float32)
    b_s = jax.random.normal(kb, (1, N, N), dtype=jnp.float32)
    V_s = jax.random.normal(kv, (N, N), dtype=jnp.float32)

    out = spatial_attention(x, W_1, W_2, W_3, b_s, V_s)
    out = jax.block_until_ready(out)

    ref = jax.block_until_ready(reference_forward(x, W_1, W_2, W_3, b_s, V_s))
    assert out.shape == (B, N, N)
    # Slightly loosened rtol only because the softmax denominator uses the EUP
    # approximate reciprocal (pl.reciprocal(approx=True)).
    np.testing.assert_allclose(np.asarray(out), np.asarray(ref), rtol=5e-3, atol=1e-5)

    print("KERNEL_OK")
</pallas_src>

<mosaic_0001>
module attributes {stable_mosaic.version = 11 : i64} {
  func.func @_spatial_attn_kernel(%arg0: i32, %arg1: memref<2x16x32xf32, #tpu.memory_space<vmem>>, %arg2: memref<32x16xf32, #tpu.memory_space<vmem>>, %arg3: memref<16x16xf32, #tpu.memory_space<vmem>>, %arg4: memref<16x16xf32, #tpu.memory_space<vmem>>, %arg5: memref<2x16x16xf32, #tpu.memory_space<vmem>>) attributes {dimension_semantics = [#tpu.dimension_semantics<parallel>], iteration_bounds = array<i64: 1>, scalar_prefetch = 0 : i64, scratch_operands = 0 : i64, tpu.core_type = #tpu.core_type<tc>, window_params = [{transform_indices = @transform_0, window_bounds = array<i64: 2, 16, 32>}, {pipeline_mode = #tpu.pipeline_mode<synchronous>, transform_indices = @transform_1, window_bounds = array<i64: 32, 16>}, {pipeline_mode = #tpu.pipeline_mode<synchronous>, transform_indices = @transform_2, window_bounds = array<i64: 16, 16>}, {pipeline_mode = #tpu.pipeline_mode<synchronous>, transform_indices = @transform_3, window_bounds = array<i64: 16, 16>}, {transform_indices = @transform_4, window_bounds = array<i64: 2, 16, 16>}]} {
    %c0 = arith.constant 0 : index
    %c0_0 = arith.constant 0 : index
    %c0_1 = arith.constant 0 : index
    %0 = vector.load %arg1[%c0, %c0_0, %c0_1] : memref<2x16x32xf32, #tpu.memory_space<vmem>>, vector<2x16x32xf32>
    %c0_2 = arith.constant 0 : index
    %c0_3 = arith.constant 0 : index
    %1 = vector.load %arg2[%c0_2, %c0_3] : memref<32x16xf32, #tpu.memory_space<vmem>>, vector<32x16xf32>
    %c0_4 = arith.constant 0 : index
    %c0_5 = arith.constant 0 : index
    %2 = vector.load %arg3[%c0_4, %c0_5] : memref<16x16xf32, #tpu.memory_space<vmem>>, vector<16x16xf32>
    %c0_6 = arith.constant 0 : index
    %c0_7 = arith.constant 0 : index
    %3 = vector.load %arg4[%c0_6, %c0_7] : memref<16x16xf32, #tpu.memory_space<vmem>>, vector<16x16xf32>
    "tpu.trace_start"() <{level = 10 : i32, message = "bnk,kt->bnt"}> : () -> ()
    %cst = arith.constant dense<0.000000e+00> : vector<2x16x16xf32>
    %4 = tpu.matmul %0, %1, %cst {dimension_numbers = #tpu.dot_dimension_numbers<[2], [0], [0, 1], [1], [0, 0, 0, 1, 1, 1], [], []>} : vector<2x16x32xf32>, vector<32x16xf32>, vector<2x16x16xf32> -> vector<2x16x16xf32>
    "tpu.trace_stop"() : () -> ()
    %5 = vector.extract_strided_slice %4 {offsets = [0, 0, 0], sizes = [2, 16, 8], strides = [1, 1, 1]} : vector<2x16x16xf32> to vector<2x16x8xf32>
    %6 = vector.extract_strided_slice %4 {offsets = [0, 0, 8], sizes = [2, 16, 8], strides = [1, 1, 1]} : vector<2x16x16xf32> to vector<2x16x8xf32>
    "tpu.trace_start"() <{level = 10 : i32, message = "bmt,bnt->bmn"}> : () -> ()
    %cst_8 = arith.constant dense<0.000000e+00> : vector<2x16x16xf32>
    %7 = tpu.matmul %6, %5, %cst_8 {dimension_numbers = #tpu.dot_dimension_numbers<[2], [2], [1], [1], [0, 0, 0, 1, 1, 1], [0], [0]>} : vector<2x16x8xf32>, vector<2x16x8xf32>, vector<2x16x16xf32> -> vector<2x16x16xf32>
    "tpu.trace_stop"() : () -> ()
    %8 = vector.shape_cast %2 : vector<16x16xf32> to vector<1x16x16xf32>
    %9 = vector.broadcast %8 : vector<1x16x16xf32> to vector<2x16x16xf32>
    %10 = arith.addf %7, %9 : vector<2x16x16xf32>
    %cst_9 = arith.constant 0.000000e+00 : f32
    %11 = vector.broadcast %cst_9 : f32 to vector<2x16x16xf32>
    %12 = arith.maximumf %10, %11 : vector<2x16x16xf32>
    "tpu.trace_start"() <{level = 10 : i32, message = "bmk,nk->bmn"}> : () -> ()
    %cst_10 = arith.constant dense<0.000000e+00> : vector<2x16x16xf32>
    %13 = tpu.matmul %12, %3, %cst_10 {dimension_numbers = #tpu.dot_dimension_numbers<[2], [1], [0, 1], [0], [0, 0, 0, 1, 1, 0], [], []>} : vector<2x16x16xf32>, vector<16x16xf32>, vector<2x16x16xf32> -> vector<2x16x16xf32>
    "tpu.trace_stop"() : () -> ()
    %cst_11 = arith.constant dense<0xFF800000> : vector<2x16xf32>
    %14 = vector.multi_reduction <maximumf>, %13, %cst_11 [2] : vector<2x16x16xf32> to vector<2x16xf32>
    %15 = vector.shape_cast %14 : vector<2x16xf32> to vector<2x16x1xf32>
    %16 = vector.broadcast %15 : vector<2x16x1xf32> to vector<2x16x16xf32>
    %17 = arith.subf %13, %16 : vector<2x16x16xf32>
    %18 = math.exp %17 : vector<2x16x16xf32>
    %cst_12 = arith.constant dense<0.000000e+00> : vector<2x16xf32>
    %19 = vector.multi_reduction <add>, %18, %cst_12 [2] : vector<2x16x16xf32> to vector<2x16xf32>
    %20 = vector.shape_cast %19 : vector<2x16xf32> to vector<2x16x1xf32>
    %21 = tpu.reciprocal %20 {approx = true} : vector<2x16x1xf32> -> vector<2x16x1xf32>
    %22 = vector.broadcast %21 : vector<2x16x1xf32> to vector<2x16x16xf32>
    %23 = arith.mulf %18, %22 : vector<2x16x16xf32>
    %c0_13 = arith.constant 0 : index
    %c0_14 = arith.constant 0 : index
    %c0_15 = arith.constant 0 : index
    %24 = vector.load %arg5[%c0_13, %c0_14, %c0_15] : memref<2x16x16xf32, #tpu.memory_space<vmem>>, vector<2x16x16xf32>
    tpu.vector_store %arg5[%c0_13, %c0_14, %c0_15], %23 {strides = array<i32>} : memref<2x16x16xf32, #tpu.memory_space<vmem>>, vector<2x16x16xf32>,
    return
  }
  func.func @transform_0(%arg0: i32) -> (i32, i32, i32) {
    %c0_i32 = arith.constant 0 : i32
    %c0_i32_0 = arith.constant 0 : i32
    %c0_i32_1 = arith.constant 0 : i32
    return %arg0, %c0_i32, %c0_i32_0 : i32, i32, i32
  }
  func.func @transform_1(%arg0: i32) -> (i32, i32) {
    %c0_i32 = arith.constant 0 : i32
    %c0_i32_0 = arith.constant 0 : i32
    %c0_i32_1 = arith.constant 0 : i32
    return %c0_i32, %c0_i32_0 : i32, i32
  }
  func.func @transform_2(%arg0: i32) -> (i32, i32) {
    %c0_i32 = arith.constant 0 : i32
    %c0_i32_0 = arith.constant 0 : i32
    %c0_i32_1 = arith.constant 0 : i32
    return %c0_i32, %c0_i32_0 : i32, i32
  }
  func.func @transform_3(%arg0: i32) -> (i32, i32) {
    %c0_i32 = arith.constant 0 : i32
    %c0_i32_0 = arith.constant 0 : i32
    %c0_i32_1 = arith.constant 0 : i32
    return %c0_i32, %c0_i32_0 : i32, i32
  }
  func.func @transform_4(%arg0: i32) -> (i32, i32, i32) {
    %c0_i32 = arith.constant 0 : i32
    %c0_i32_0 = arith.constant 0 : i32
    %c0_i32_1 = arith.constant 0 : i32
    return %arg0, %c0_i32, %c0_i32_0 : i32, i32, i32
  }
}

</mosaic_0001>

<llo_original>
// kernel: tpu_custom_call.1
$region0: #{tpu_custom_call.1}
  #allocation0 [shape = 'u32[]', space=smem, size = 0x4, offset = 0x4, fixed_abs, tag = 'smem constant byte address 0x4 - core index']
  #allocation1 [shape = 'u32[144,128]{1,0:T(1,128)}', space=vmem, size = 0x12000, scoped, tag = 'internal scratch']
  %s0 = inlined_call_operand.vmem [shape: f32[2,16,32], index: 0, kind: input, shape index: {}]
  %s1 = inlined_call_operand.vmem [shape: f32[32,16], index: 1, kind: input, shape index: {}]
  %s2 = inlined_call_operand.vmem [shape: f32[16,16], index: 2, kind: input, shape index: {}]
  %s3 = inlined_call_operand.hbm [shape: f32[16,16], index: 3, kind: input, shape index: {}]
  %s4 = inlined_call_operand.hbm [shape: f32[2,16,16], index: 4, kind: output, shape index: {}]
  %s5 = sld [smem:[#allocation0]]
  $region30: #{tpu_custom_call.1} parent=0
    _
  %s7 = ssub.s32 1, %s5
  %s8 = scalar_select 0, %s7, %s5
  $region1: #{tpu_custom_call.1} parent=0
    #allocation2 [shape = 'u8[8192]{0}', space=vmem, size = 0x2000, scoped, tag = 'input window, operand 3, single buffered']
    #allocation3 [shape = 's32[1]{0}', space=sflag, size = 0x4, scoped, tag = 'scoped memory for tpu_custom_call.1']
    #allocation4 [shape = 's32[1]{0}', space=sflag, size = 0x4, scoped, tag = 'scoped memory for tpu_custom_call.1']
    #allocation5 [shape = 'u8[16384]{0}', space=vmem, size = 0x4000, scoped, tag = 'output window, operand 0, single buffered']
    %9 = vsyncpa [#allocation3], 0
    %10 = vsyncpa [#allocation4], 0
    // Predicated region
    $region2: #{tpu_custom_call.1} parent=1 // pred_check
      _
    $region3: #{tpu_custom_call.1} parent=1 // pred_check_branch
      %12 = sbr.rel (0) target = $region5
    $region4: #{tpu_custom_call.1} parent=1 // pred_region
      _
    $region5: #{tpu_custom_call.1} parent=1 // pred_fallthru
      _
    // Predicated region
    $region6: #{tpu_custom_call.1} parent=1 // pred_check
      _
    $region7: #{tpu_custom_call.1} parent=1 // pred_check_branch
      %14 = sbr.rel (0) target = $region9
    $region8: #{tpu_custom_call.1} parent=1 // pred_region
      _
    $region9: #{tpu_custom_call.1} parent=1 // pred_fallthru
      _
    // Predicated region
    $region10: #{tpu_custom_call.1} parent=1 // pred_check
      _
    $region11: #{tpu_custom_call.1} parent=1 // pred_check_branch
      %16 = sbr.rel (0) target = $region13
    $region12: #{tpu_custom_call.1} parent=1 // pred_region
      _
    $region13: #{tpu_custom_call.1} parent=1 // pred_fallthru
      _
    // Predicated region
    $region14: #{tpu_custom_call.1} parent=1 // pred_check
      _
    $region15: #{tpu_custom_call.1} parent=1 // pred_check_branch
      %18 = sbr.rel (0) target = $region17
    $region16: #{tpu_custom_call.1} parent=1 // pred_region
      %s20 = ssub.s32 256, 256
      %21 = vsyncadd [#allocation3], %s20
      %s22 = sshll.u32 [#allocation2], 4
      %s23 = int_to_ptr.vmem [resolvable:$true] %s22
      %28 = dma.hbm_to_vmem [thread:$0]  %s3, 256, %s23, [#allocation3], 128, 128, 8
    $region17: #{tpu_custom_call.1} parent=1 // pred_fallthru
      _
    // Predicated region
    $region18: #{tpu_custom_call.1} parent=1 // pred_check
      _
    $region19: #{tpu_custom_call.1} parent=1 // pred_check_branch
      %30 = sbr.rel (0) target = $region21
    $region20: #{tpu_custom_call.1} parent=1 // pred_region
      %31 = dma.done [#allocation3], 256
    $region21: #{tpu_custom_call.1} parent=1 // pred_fallthru
      _
    %v32 = vld [vmem:[%s0] sm:$0xff]
    %v33 = vld [vmem:[%s0 + $0x8] sm:$0xff]
    %v34 = vld [vmem:[%s0 + $0x10] sm:$0xff]
    %v35 = vld [vmem:[%s0 + $0x18] sm:$0xff]
    %v36 = vld [vmem:[%s1] sm:$0xff]
    %v37 = vld [vmem:[%s1 + $0x8] sm:$0xff]
    %v38 = vld [vmem:[%s1 + $0x10] sm:$0xff]
    %v39 = vld [vmem:[%s1 + $0x18] sm:$0xff]
    %v40 = vld [vmem:[%s2] sm:$0xff]
    %v41 = vld [vmem:[%s2 + $0x8] sm:$0xff]
    %v42 = vld [vmem:[#allocation2] sm:$0xff]
    %v43 = vld [vmem:[#allocation2 + $0x8] sm:$0xff]
    %vm44 = vcmask 261120
    %v46 = vsel %vm44, %v32, 0
    %v49 = vsel %vm44, %v33, 0
    %v52 = vsel %vm44, %v34, 0
    %v55 = vsel %vm44, %v35, 0
    %57 = vmatprep.subr.mxu0 0.0
    %58 = vmatpush1.msra.mxu0 %v36
    %59 = vmatprep.subr.mxu0 0.0
    %60 = vmatpush1.msra.mxu0 %v37
    %61 = vmatprep.subr.mxu0 0.0
    %62 = vmatpush1.msra.mxu0 %v38
    %63 = vmatprep.subr.mxu0 0.0
    %64 = vmatpush1.msra.mxu0 %v39
    %65 = vmatprep.subr.mxu0 0.0
    %66 = vmatpush1.msra.mxu0 0.0
    %67 = vmatprep.subr.mxu0 0.0
    %68 = vmatpush1.msra.mxu0 0.0
    %69 = vmatprep.subr.mxu0 0.0
    %70 = vmatpush1.msra.mxu0 0.0
    %71 = vmatprep.subr.mxu0 0.0
    %72 = vmatpush1.msra.mxu0 0.0
    %73 = vmatprep.subr.mxu0 0.0
    %74 = vmatpush1.msra.mxu0 0.0
    %75 = vmatprep.subr.mxu0 0.0
    %76 = vmatpush1.msra.mxu0 0.0
    %77 = vmatprep.subr.mxu0 0.0
    %78 = vmatpush1.msra.mxu0 0.0
    %79 = vmatprep.subr.mxu0 0.0
    %80 = vmatpush1.msra.mxu0 0.0
    %81 = vmatprep.subr.mxu0 0.0
    %82 = vmatpush1.msra.mxu0 0.0
    %83 = vmatprep.subr.mxu0 0.0
    %84 = vmatpush1.msra.mxu0 0.0
    %85 = vmatprep.subr.mxu0 0.0
    %86 = vmatpush1.msra.mxu0 0.0
    %87 = vmatprep.subr.mxu0 0.0
    %88 = vmatpush1.msra.mxu0 0.0
    %89 = vmatprep.subr.mxu0 0.0
    %90 = vmatpush1.msra.mxu0 0.0
    %91 = vmatprep.subr.mxu0 0.0
    %92 = vmatpush1.msra.mxu0 0.0
    %93 = vmatprep.subr.mxu0 0.0
    %94 = vmatpush1.msra.mxu0 0.0
    %95 = vmatprep.subr.mxu0 0.0
    %96 = vmatpush1.msra.mxu0 0.0
    %97 = vmatprep.subr.mxu0 0.0
    %98 = vmatpush1.msra.mxu0 0.0
    %99 = vmatprep.subr.mxu0 0.0
    %100 = vmatpush1.msra.mxu0 0.0
    %101 = vmatprep.subr.mxu0 0.0
    %102 = vmatpush1.msra.mxu0 0.0
    %103 = vmatprep.subr.mxu0 0.0
    %104 = vmatpush1.msra.mxu0 0.0
    %105 = vmatprep.subr.mxu0 0.0
    %106 = vmatpush1.msra.mxu0 0.0
    %107 = vmatprep.subr.mxu0 0.0
    %108 = vmatpush1.msra.mxu0 0.0
    %109 = vmatprep.subr.mxu0 0.0
    %110 = vmatpush1.msra.mxu0 0.0
    %111 = vmatprep.subr.mxu0 0.0
    %112 = vmatpush1.msra.mxu0 0.0
    %113 = vmatprep.subr.mxu0 0.0
    %114 = vmatpush1.msra.mxu0 0.0
    %115 = vmatprep.subr.mxu0 0.0
    %116 = vmatpush1.msra.mxu0 0.0
    %117 = vmatprep.subr.mxu0 0.0
    %118 = vmatpush1.msra.mxu0 0.0
    %119 = vmatprep.subr.mxu0 0.0
    %120 = vmatpush1.msra.mxu0 0.0
    %121 = vmatprep.mubr.f32.mxu0 0.0
    %122 = vmatmul.mubr.f32.gmra.mrb[0].mxu0 %v46
    %v123 = vpop.f32.mrb[0].mxu0
    %v124 = vadd.f32 0.0, %v123
    %v125 = vpop.f32.mrb[0].mxu0
    %126 = vmatprep.mubr.f32.mxu0 0.0
    %127 = vmatmul.mubr.f32.gmra.mrb[0].mxu0 %v49
    %v128 = vpop.f32.mrb[0].mxu0
    %v129 = vadd.f32 0.0, %v128
    %v130 = vpop.f32.mrb[0].mxu0
    %131 = vmatprep.mubr.f32.mxu0 0.0
    %132 = vmatmul.mubr.f32.gmra.mrb[0].mxu0 %v52
    %v133 = vpop.f32.mrb[0].mxu0
    %v134 = vadd.f32 0.0, %v133
    %v135 = vpop.f32.mrb[0].mxu0
    %136 = vmatprep.mubr.f32.mxu0 0.0
    %137 = vmatmul.mubr.f32.gmra.mrb[0].mxu0 %v55
    %v138 = vpop.f32.mrb[0].mxu0
    %v139 = vadd.f32 0.0, %v138
    %v140 = vpop.f32.mrb[0].mxu0
    %141 = vdwg.mxu0
    %144 = vrot.lane.b32.xlu0 %v124, 120
    %v145 = vpop.permute.xlu0 %144
    %146 = vrot.lane.b32.xlu0 %v129, 120
    %v147 = vpop.permute.xlu0 %146
    %vm148 = vcmask 64512
    %v149 = vsel %vm148, %v145, 0
    %v151 = vsel %vm148, %v147, 0
    %v153 = vsel %vm148, %v124, 0
    %v155 = vsel %vm148, %v129, 0
    %157 = vmatprep.subr.mxu0 0.0
    %158 = vmatpush1.xpose.msra.mxu0 %v153
    %159 = vmatprep.subr.mxu0 0.0
    %160 = vmatpush1.xpose.msra.mxu0 %v155
    %161 = vmatprep.subr.mxu0 0.0
    %162 = vmatpush1.xpose.msra.mxu0 0.0
    %163 = vmatprep.subr.mxu0 0.0
    %164 = vmatpush1.xpose.msra.mxu0 0.0
    %165 = vmatprep.subr.mxu0 0.0
    %166 = vmatpush1.xpose.msra.mxu0 0.0
    %167 = vmatprep.subr.mxu0 0.0
    %168 = vmatpush1.xpose.msra.mxu0 0.0
    %169 = vmatprep.subr.mxu0 0.0
    %170 = vmatpush1.xpose.msra.mxu0 0.0
    %171 = vmatprep.subr.mxu0 0.0
    %172 = vmatpush1.xpose.msra.mxu0 0.0
    %173 = vmatprep.subr.mxu0 0.0
    %174 = vmatpush1.xpose.msra.mxu0 0.0
    %175 = vmatprep.subr.mxu0 0.0
    %176 = vmatpush1.xpose.msra.mxu0 0.0
    %177 = vmatprep.subr.mxu0 0.0
    %178 = vmatpush1.xpose.msra.mxu0 0.0
    %179 = vmatprep.subr.mxu0 0.0
    %180 = vmatpush1.xpose.msra.mxu0 0.0
    %181 = vmatprep.subr.mxu0 0.0
    %182 = vmatpush1.xpose.msra.mxu0 0.0
    %183 = vmatprep.subr.mxu0 0.0
    %184 = vmatpush1.xpose.msra.mxu0 0.0
    %185 = vmatprep.subr.mxu0 0.0
    %186 = vmatpush1.xpose.msra.mxu0 0.0
    %187 = vmatprep.subr.mxu0 0.0
    %188 = vmatpush1.xpose.msra.mxu0 0.0
    %189 = vmatprep.subr.mxu0 0.0
    %190 = vmatpush1.xpose.msra.mxu0 0.0
    %191 = vmatprep.subr.mxu0 0.0
    %192 = vmatpush1.xpose.msra.mxu0 0.0
    %193 = vmatprep.subr.mxu0 0.0
    %194 = vmatpush1.xpose.msra.mxu0 0.0
    %195 = vmatprep.subr.mxu0 0.0
    %196 = vmatpush1.xpose.msra.mxu0 0.0
    %197 = vmatprep.subr.mxu0 0.0
    %198 = vmatpush1.xpose.msra.mxu0 0.0
    %199 = vmatprep.subr.mxu0 0.0
    %200 = vmatpush1.xpose.msra.mxu0 0.0
    %201 = vmatprep.subr.mxu0 0.0
    %202 = vmatpush1.xpose.msra.mxu0 0.0
    %203 = vmatprep.subr.mxu0 0.0
    %204 = vmatpush1.xpose.msra.mxu0 0.0
    %205 = vmatprep.subr.mxu0 0.0
    %206 = vmatpush1.xpose.msra.mxu0 0.0
    %207 = vmatprep.subr.mxu0 0.0
    %208 = vmatpush1.xpose.msra.mxu0 0.0
    %209 = vmatprep.subr.mxu0 0.0
    %210 = vmatpush1.xpose.msra.mxu0 0.0
    %211 = vmatprep.subr.mxu0 0.0
    %212 = vmatpush1.xpose.msra.mxu0 0.0
    %213 = vmatprep.subr.mxu0 0.0
    %214 = vmatpush1.xpose.msra.mxu0 0.0
    %215 = vmatprep.subr.mxu0 0.0
    %216 = vmatpush1.xpose.msra.mxu0 0.0
    %217 = vmatprep.subr.mxu0 0.0
    %218 = vmatpush1.xpose.msra.mxu0 0.0
    %219 = vmatprep.subr.mxu0 0.0
    %220 = vmatpush1.xpose.msra.mxu0 0.0
    %221 = vmatprep.mubr.f32.mxu0 0.0
    %222 = vmatmul.mubr.f32.gmra.mrb[0].mxu0 %v149
    %v223 = vpop.f32.mrb[0].mxu0
    %v224 = vadd.f32 %v40, %v223
    %v225 = vpop.f32.mrb[0].mxu0
    %226 = vmatprep.mubr.f32.mxu0 0.0
    %227 = vmatmul.mubr.f32.gmra.mrb[0].mxu0 %v151
    %v228 = vpop.f32.mrb[0].mxu0
    %v229 = vadd.f32 %v41, %v228
    %v230 = vpop.f32.mrb[0].mxu0
    %231 = vdwg.mxu0
    %234 = vrot.lane.b32.xlu0 %v134, 120
    %v235 = vpop.permute.xlu0 %234
    %236 = vrot.lane.b32.xlu0 %v139, 120
    %v237 = vpop.permute.xlu0 %236
    %v238 = vsel %vm148, %v235, 0
    %v240 = vsel %vm148, %v237, 0
    %v242 = vsel %vm148, %v134, 0
    %v244 = vsel %vm148, %v139, 0
    %246 = vmatprep.subr.mxu0 0.0
    %247 = vmatpush1.xpose.msra.mxu0 %v242
    %248 = vmatprep.subr.mxu0 0.0
    %249 = vmatpush1.xpose.msra.mxu0 %v244
    %250 = vmatprep.subr.mxu0 0.0
    %251 = vmatpush1.xpose.msra.mxu0 0.0
    %252 = vmatprep.subr.mxu0 0.0
    %253 = vmatpush1.xpose.msra.mxu0 0.0
    %254 = vmatprep.subr.mxu0 0.0
    %255 = vmatpush1.xpose.msra.mxu0 0.0
    %256 = vmatprep.subr.mxu0 0.0
    %257 = vmatpush1.xpose.msra.mxu0 0.0
    %258 = vmatprep.subr.mxu0 0.0
    %259 = vmatpush1.xpose.msra.mxu0 0.0
    %260 = vmatprep.subr.mxu0 0.0
    %261 = vmatpush1.xpose.msra.mxu0 0.0
    %262 = vmatprep.subr.mxu0 0.0
    %263 = vmatpush1.xpose.msra.mxu0 0.0
    %264 = vmatprep.subr.mxu0 0.0
    %265 = vmatpush1.xpose.msra.mxu0 0.0
    %266 = vmatprep.subr.mxu0 0.0
    %267 = vmatpush1.xpose.msra.mxu0 0.0
    %268 = vmatprep.subr.mxu0 0.0
    %269 = vmatpush1.xpose.msra.mxu0 0.0
    %270 = vmatprep.subr.mxu0 0.0
    %271 = vmatpush1.xpose.msra.mxu0 0.0
    %272 = vmatprep.subr.mxu0 0.0
    %273 = vmatpush1.xpose.msra.mxu0 0.0
    %274 = vmatprep.subr.mxu0 0.0
    %275 = vmatpush1.xpose.msra.mxu0 0.0
    %276 = vmatprep.subr.mxu0 0.0
    %277 = vmatpush1.xpose.msra.mxu0 0.0
    %278 = vmatprep.subr.mxu0 0.0
    %279 = vmatpush1.xpose.msra.mxu0 0.0
    %280 = vmatprep.subr.mxu0 0.0
    %281 = vmatpush1.xpose.msra.mxu0 0.0
    %282 = vmatprep.subr.mxu0 0.0
    %283 = vmatpush1.xpose.msra.mxu0 0.0
    %284 = vmatprep.subr.mxu0 0.0
    %285 = vmatpush1.xpose.msra.mxu0 0.0
    %286 = vmatprep.subr.mxu0 0.0
    %287 = vmatpush1.xpose.msra.mxu0 0.0
    %288 = vmatprep.subr.mxu0 0.0
    %289 = vmatpush1.xpose.msra.mxu0 0.0
    %290 = vmatprep.subr.mxu0 0.0
    %291 = vmatpush1.xpose.msra.mxu0 0.0
    %292 = vmatprep.subr.mxu0 0.0
    %293 = vmatpush1.xpose.msra.mxu0 0.0
    %294 = vmatprep.subr.mxu0 0.0
    %295 = vmatpush1.xpose.msra.mxu0 0.0
    %296 = vmatprep.subr.mxu0 0.0
    %297 = vmatpush1.xpose.msra.mxu0 0.0
    %298 = vmatprep.subr.mxu0 0.0
    %299 = vmatpush1.xpose.msra.mxu0 0.0
    %300 = vmatprep.subr.mxu0 0.0
    %301 = vmatpush1.xpose.msra.mxu0 0.0
    %302 = vmatprep.subr.mxu0 0.0
    %303 = vmatpush1.xpose.msra.mxu0 0.0
    %304 = vmatprep.subr.mxu0 0.0
    %305 = vmatpush1.xpose.msra.mxu0 0.0
    %306 = vmatprep.subr.mxu0 0.0
    %307 = vmatpush1.xpose.msra.mxu0 0.0
    %308 = vmatprep.subr.mxu0 0.0
    %309 = vmatpush1.xpose.msra.mxu0 0.0
    %310 = vmatprep.mubr.f32.mxu0 0.0
    %311 = vmatmul.mubr.f32.gmra.mrb[0].mxu0 %v238
    %v312 = vpop.f32.mrb[0].mxu0
    %v313 = vadd.f32 %v40, %v312
    %v314 = vpop.f32.mrb[0].mxu0
    %315 = vmatprep.mubr.f32.mxu0 0.0
    %316 = vmatmul.mubr.f32.gmra.mrb[0].mxu0 %v240
    %v317 = vpop.f32.mrb[0].mxu0
    %v318 = vadd.f32 %v41, %v317
    %v319 = vpop.f32.mrb[0].mxu0
    %320 = vdwg.mxu0
    %v321 = vmax.f32 %v224, 0.0
    %v322 = vmax.f32 %v229, 0.0
    %v323 = vmax.f32 %v313, 0.0
    %v324 = vmax.f32 %v318, 0.0
    %vm325 = vcmask 130048
    %v327 = vsel %vm325, %v321, 0
    %v330 = vsel %vm325, %v322, 0
    %v333 = vsel %vm325, %v323, 0
    %v336 = vsel %vm325, %v324, 0
    %v339 = vsel %vm325, %v42, 0
    %v342 = vsel %vm325, %v43, 0
    %344 = vmatprep.subr.mxu0 0.0
    %345 = vmatpush1.xpose.msra.mxu0 %v339
    %346 = vmatprep.subr.mxu0 0.0
    %347 = vmatpush1.xpose.msra.mxu0 %v342
    %348 = vmatprep.subr.mxu0 0.0
    %349 = vmatpush1.xpose.msra.mxu0 0.0
    %350 = vmatprep.subr.mxu0 0.0
    %351 = vmatpush1.xpose.msra.mxu0 0.0
    %352 = vmatprep.subr.mxu0 0.0
    %353 = vmatpush1.xpose.msra.mxu0 0.0
    %354 = vmatprep.subr.mxu0 0.0
    %355 = vmatpush1.xpose.msra.mxu0 0.0
    %356 = vmatprep.subr.mxu0 0.0
    %357 = vmatpush1.xpose.msra.mxu0 0.0
    %358 = vmatprep.subr.mxu0 0.0
    %359 = vmatpush1.xpose.msra.mxu0 0.0
    %360 = vmatprep.subr.mxu0 0.0
    %361 = vmatpush1.xpose.msra.mxu0 0.0
    %362 = vmatprep.subr.mxu0 0.0
    %363 = vmatpush1.xpose.msra.mxu0 0.0
    %364 = vmatprep.subr.mxu0 0.0
    %365 = vmatpush1.xpose.msra.mxu0 0.0
    %366 = vmatprep.subr.mxu0 0.0
    %367 = vmatpush1.xpose.msra.mxu0 0.0
    %368 = vmatprep.subr.mxu0 0.0
    %369 = vmatpush1.xpose.msra.mxu0 0.0
    %370 = vmatprep.subr.mxu0 0.0
    %371 = vmatpush1.xpose.msra.mxu0 0.0
    %372 = vmatprep.subr.mxu0 0.0
    %373 = vmatpush1.xpose.msra.mxu0 0.0
    %374 = vmatprep.subr.mxu0 0.0
    %375 = vmatpush1.xpose.msra.mxu0 0.0
    %376 = vmatprep.subr.mxu0 0.0
    %377 = vmatpush1.xpose.msra.mxu0 0.0
    %378 = vmatprep.subr.mxu0 0.0
    %379 = vmatpush1.xpose.msra.mxu0 0.0
    %380 = vmatprep.subr.mxu0 0.0
    %381 = vmatpush1.xpose.msra.mxu0 0.0
    %382 = vmatprep.subr.mxu0 0.0
    %383 = vmatpush1.xpose.msra.mxu0 0.0
    %384 = vmatprep.subr.mxu0 0.0
    %385 = vmatpush1.xpose.msra.mxu0 0.0
    %386 = vmatprep.subr.mxu0 0.0
    %387 = vmatpush1.xpose.msra.mxu0 0.0
    %388 = vmatprep.subr.mxu0 0.0
    %389 = vmatpush1.xpose.msra.mxu0 0.0
    %390 = vmatprep.subr.mxu0 0.0
    %391 = vmatpush1.xpose.msra.mxu0 0.0
    %392 = vmatprep.subr.mxu0 0.0
    %393 = vmatpush1.xpose.msra.mxu0 0.0
    %394 = vmatprep.subr.mxu0 0.0
    %395 = vmatpush1.xpose.msra.mxu0 0.0
    %396 = vmatprep.subr.mxu0 0.0
    %397 = vmatpush1.xpose.msra.mxu0 0.0
    %398 = vmatprep.subr.mxu0 0.0
    %399 = vmatpush1.xpose.msra.mxu0 0.0
    %400 = vmatprep.subr.mxu0 0.0
    %401 = vmatpush1.xpose.msra.mxu0 0.0
    %402 = vmatprep.subr.mxu0 0.0
    %403 = vmatpush1.xpose.msra.mxu0 0.0
    %404 = vmatprep.subr.mxu0 0.0
    %405 = vmatpush1.xpose.msra.mxu0 0.0
    %406 = vmatprep.subr.mxu0 0.0
    %407 = vmatpush1.xpose.msra.mxu0 0.0
    %408 = vmatprep.mubr.f32.mxu0 0.0
    %409 = vmatmul.mubr.f32.gmra.mrb[0].mxu0 %v327
    %v410 = vpop.f32.mrb[0].mxu0
    %v411 = vadd.f32 0.0, %v410
    %v412 = vpop.f32.mrb[0].mxu0
    %413 = vmatprep.mubr.f32.mxu0 0.0
    %414 = vmatmul.mubr.f32.gmra.mrb[0].mxu0 %v330
    %v415 = vpop.f32.mrb[0].mxu0
    %v416 = vadd.f32 0.0, %v415
    %v417 = vpop.f32.mrb[0].mxu0
    %418 = vmatprep.mubr.f32.mxu0 0.0
    %419 = vmatmul.mubr.f32.gmra.mrb[0].mxu0 %v333
    %v420 = vpop.f32.mrb[0].mxu0
    %v421 = vadd.f32 0.0, %v420
    %v422 = vpop.f32.mrb[0].mxu0
    %423 = vmatprep.mubr.f32.mxu0 0.0
    %424 = vmatmul.mubr.f32.gmra.mrb[0].mxu0 %v336
    %v425 = vpop.f32.mrb[0].mxu0
    %v426 = vadd.f32 0.0, %v425
    %v427 = vpop.f32.mrb[0].mxu0
    %428 = vdwg.mxu0
    %v429 = vsel %vm325, %v411, -inf
    %430 = vmax.xlane.f32.xlu0 %v429
    %v431 = vpop.xlane.xlu0 %430
    %v432 = vsel %vm325, %v416, -inf
    %433 = vmax.xlane.f32.xlu0 %v432
    %v434 = vpop.xlane.xlu0 %433
    %v435 = vsel %vm325, %v421, -inf
    %436 = vmax.xlane.f32.xlu0 %v435
    %v437 = vpop.xlane.xlu0 %436
    %v438 = vsel %vm325, %v426, -inf
    %439 = vmax.xlane.f32.xlu0 %v438
    %v440 = vpop.xlane.xlu0 %439
    %v441 = vsub.f32 %v411, %v431
    %v442 = vsub.f32 %v416, %v434
    %v443 = vsub.f32 %v421, %v437
    %v444 = vsub.f32 %v426, %v440
    %v445 = vmul.f32 %v441, 1.442695
    %v446 = vpow.pop %v445
    %v447 = vmul.f32 %v442, 1.442695
    %v448 = vpow.pop %v447
    %v449 = vmul.f32 %v443, 1.442695
    %v450 = vpow.pop %v449
    %v451 = vmul.f32 %v444, 1.442695
    %v452 = vpow.pop %v451
    %v453 = vsel %vm325, %v446, 0.0
    %454 = vadd.xlane.f32.xlu0 %v453
    %v455 = vpop.xlane.xlu0 %454
    %v456 = vsel %vm325, %v448, 0.0
    %457 = vadd.xlane.f32.xlu0 %v456
    %v458 = vpop.xlane.xlu0 %457
    %v459 = vsel %vm325, %v450, 0.0
    %460 = vadd.xlane.f32.xlu0 %v459
    %v461 = vpop.xlane.xlu0 %460
    %v462 = vsel %vm325, %v452, 0.0
    %463 = vadd.xlane.f32.xlu0 %v462
    %v464 = vpop.xlane.xlu0 %463
    %v465 = vrcp.pop %v455
    %v466 = vrcp.pop %v458
    %v467 = vrcp.pop %v461
    %v468 = vrcp.pop %v464
    %v469 = vmul.f32 %v446, %v465
    %v470 = vmul.f32 %v448, %v466
    %v471 = vmul.f32 %v450, %v467
    %v472 = vmul.f32 %v452, %v468
    %473 = vst.msk [vmem:[#allocation5] sm:$0xff] %vm325, %v469
    %474 = vst.msk [vmem:[#allocation5 + $0x8] sm:$0xff] %vm325, %v470
    %475 = vst.msk [vmem:[#allocation5 + $0x10] sm:$0xff] %vm325, %v471
    %476 = vst.msk [vmem:[#allocation5 + $0x18] sm:$0xff] %vm325, %v472
    // Predicated region
    $region22: #{tpu_custom_call.1} parent=1 // pred_check
      _
    $region23: #{tpu_custom_call.1} parent=1 // pred_check_branch
      %478 = sbr.rel (0) target = $region25
    $region24: #{tpu_custom_call.1} parent=1 // pred_region
      %s480 = ssub.s32 512, 512
      %481 = vsyncadd [#allocation4], %s480
      %s482 = sshll.u32 [#allocation5], 4
      %s483 = int_to_ptr.vmem [resolvable:$true] %s482
      %488 = dma.vmem_to_hbm [thread:$0]  %s483, 512, %s4, [#allocation4], 128, 128, 8
    $region25: #{tpu_custom_call.1} parent=1 // pred_fallthru
      _
    // Predicated region
    $region26: #{tpu_custom_call.1} parent=1 // pred_check
      _
    $region27: #{tpu_custom_call.1} parent=1 // pred_check_branch
      %490 = sbr.rel (0) target = $region29
    $region28: #{tpu_custom_call.1} parent=1 // pred_region
      %491 = dma.done [#allocation4], 512
    $region29: #{tpu_custom_call.1} parent=1 // pred_fallthru
      _
    %492 = vsyncpa [#allocation3], 1
    %493 = vsyncpa [#allocation4], 1

</llo_original>
